<compile_context>
chip_gen: v5e
topology: v5e:2x2
jax: 0.10.0
libtpu: 0.0.40
codegen_flags: <defaults>
</compile_context>

<pallas_src>
import jax
import jax.numpy as jnp
import numpy as np
from jax import lax
from jax.experimental import pallas as pl
from jax.experimental.pallas import tpu as pltpu


def encoder_kernel(x_ref, w1_ref, b1_ref, wra_ref, bra_ref, wrb_ref, brb_ref, out_ref):
    x = x_ref[...].astype(jnp.float32)            # (N*C, L)
    NC, L = x.shape

    # Hoisted loop-invariants: edge masks and bias broadcasts (reused by all 7 convs).
    col = lax.broadcasted_iota(jnp.int32, (NC, L), 1)
    is_first = col == 0
    is_last = col == L - 1
    b1 = jnp.broadcast_to(b1_ref[...], (NC, L))   # reused 5x
    bra = jnp.broadcast_to(bra_ref[...], (NC, L))
    brb = jnp.broadcast_to(brb_ref[...], (NC, L))

    def conv(v, w, b_full):
        # Lane shifts (XLU) + edge zeroing.  shift = L-1 is the non-negative
        # equivalent of a circular shift by -1 (pltpu.roll rejects negatives).
        v_prev = jnp.where(is_first, 0.0, pltpu.roll(v, shift=1, axis=1))       # v[:, l-1]
        v_next = jnp.where(is_last, 0.0, pltpu.roll(v, shift=L - 1, axis=1))    # v[:, l+1]
        taps = jnp.concatenate([v_prev, v, v_next], axis=0)                     # (3*N*C, L)
        return jnp.dot(w, taps, preferred_element_type=jnp.float32) + b_full

    w1 = w1_ref[...]
    # Forward chain exactly as the PyTorch forward: all five stages reuse
    # conv1d_1's weights (conv1d_2..5 are dead parameters, never used).
    x1 = conv(x, w1, b1)
    x2 = conv(x1, w1, b1) + x1
    x3 = conv(x2, w1, b1)
    x4 = conv(x3, w1, b1) + x3
    x5 = conv(x4, w1, b1) + x4

    # ResidualLayer: conv -> ReLU -> conv, add residual, ReLU.
    # TODO(synk): the original PyTorch calls ResidualLayer() without `in_channels`
    # and applies Conv2d(3x3) to a 3-D (N, C, L) tensor (broken as written);
    # implemented here as the direct 1-D analog (kernel_size=3, padding=1).
    y = jnp.maximum(conv(x5, wra_ref[...], bra), 0.0)
    y = conv(y, wrb_ref[...], brb) + x5
    out_ref[...] = jnp.maximum(y, 0.0).astype(out_ref.dtype)


def _pack_conv(w_oik, b, n_batch):
    """Host-side prepack of a torch-layout Conv1d weight/bias.

    w_oik: (C_out, C_in, 3), b: (C_out,) ->
      W : (N*C_out, 3*N*C_in) block-diagonal over the batch, tap-major columns
          so it contracts directly against concat([x_prev, x, x_next], axis=0).
      bp: (N*C_out, 1)
    """
    w = np.asarray(w_oik, np.float32)
    C_out, C_in, K = w.shape
    NC_in = n_batch * C_in
    W = np.zeros((n_batch * C_out, K * NC_in), np.float32)
    for k in range(K):
        for n in range(n_batch):
            W[n * C_out:(n + 1) * C_out,
              k * NC_in + n * C_in: k * NC_in + (n + 1) * C_in] = w[:, :, k]
    bp = np.tile(np.asarray(b, np.float32), n_batch).reshape(n_batch * C_out, 1)
    return jnp.asarray(W), jnp.asarray(bp)


def vqvae_encoder(x, w1_oik, b1, wra_oik, bra, wrb_oik, brb):
    N, C, L = x.shape
    NC = N * C
    w1p, b1p = _pack_conv(w1_oik, b1, N)
    wra_p, bra_p = _pack_conv(wra_oik, bra, N)
    wrb_p, brb_p = _pack_conv(wrb_oik, brb, N)

    # Single invocation, no grid: every array is a full-extent VMEM block.
    out = pl.pallas_call(
        encoder_kernel,
        out_shape=jax.ShapeDtypeStruct((NC, L), x.dtype),
    )(x.reshape(NC, L), w1p, b1p, wra_p, bra_p, wrb_p, brb_p)
    return out.reshape(N, C, L)


# ---------------- pure-JAX reference (for correctness check) ----------------
def _conv1d_ref(x, w_oik, b):
    y = lax.conv_general_dilated(x, w_oik, window_strides=(1,), padding=((1, 1),),
                                 dimension_numbers=("NCH", "OIH", "NCH"))
    return y + b[None, :, None]


def _encoder_ref(x, w1_oik, b1, wra_oik, bra, wrb_oik, brb):
    conv = lambda v: _conv1d_ref(v, w1_oik, b1)
    x1 = conv(x)
    x2 = conv(x1) + x1
    x3 = conv(x2)
    x4 = conv(x3) + x3
    x5 = conv(x4) + x4
    y = jnp.maximum(_conv1d_ref(x5, wra_oik, bra), 0.0)
    y = _conv1d_ref(y, wrb_oik, brb) + x5
    return jnp.maximum(y, 0.0)


if __name__ == "__main__":
    key = jax.random.PRNGKey(0)
    N, C, L = 2, 4, 128  # small shapes: batch=2, in_channels=4, seq len=128
    ks = jax.random.split(key, 4)
    x = jax.random.normal(ks[0], (N, C, L), jnp.float32)

    scale = 1.0 / np.sqrt(C * 3)

    def init_conv(k):
        kw, kb = jax.random.split(k)
        w = jax.random.uniform(kw, (C, C, 3), jnp.float32, -scale, scale)  # torch (O, I, K)
        b = jax.random.uniform(kb, (C,), jnp.float32, -scale, scale)
        return w, b

    w1_oik, b1 = init_conv(ks[1])      # conv1d_1 (the only conv1d used in forward)
    wra_oik, bra = init_conv(ks[2])    # residual conv #1
    wrb_oik, brb = init_conv(ks[3])    # residual conv #2

    out = vqvae_encoder(x, w1_oik, b1, wra_oik, bra, wrb_oik, brb)
    out = jax.block_until_ready(out)

    ref = _encoder_ref(x, w1_oik, b1, wra_oik, bra, wrb_oik, brb)
    np.testing.assert_allclose(np.asarray(out), np.asarray(ref), rtol=1e-4, atol=1e-4)
    print("KERNEL_OK")
</pallas_src>

<mosaic_0001>
module attributes {stable_mosaic.version = 11 : i64} {
  func.func @encoder_kernel(%arg0: memref<8x128xf32, #tpu.memory_space<vmem>>, %arg1: memref<8x24xf32, #tpu.memory_space<vmem>>, %arg2: memref<8x1xf32, #tpu.memory_space<vmem>>, %arg3: memref<8x24xf32, #tpu.memory_space<vmem>>, %arg4: memref<8x1xf32, #tpu.memory_space<vmem>>, %arg5: memref<8x24xf32, #tpu.memory_space<vmem>>, %arg6: memref<8x1xf32, #tpu.memory_space<vmem>>, %arg7: memref<8x128xf32, #tpu.memory_space<vmem>>) attributes {dimension_semantics = [], scalar_prefetch = 0 : i64, scratch_operands = 0 : i64, tpu.core_type = #tpu.core_type<tc>} {
    %c0 = arith.constant 0 : index
    %c0_0 = arith.constant 0 : index
    %0 = vector.load %arg0[%c0, %c0_0] : memref<8x128xf32, #tpu.memory_space<vmem>>, vector<8x128xf32>
    %1 = tpu.iota {dimensions = array<i32: 1>} : vector<8x128xi32>
    %c0_i32 = arith.constant 0 : i32
    %2 = vector.broadcast %c0_i32 : i32 to vector<8x128xi32>
    %3 = arith.cmpi eq, %1, %2 : vector<8x128xi32>
    %c127_i32 = arith.constant 127 : i32
    %4 = vector.broadcast %c127_i32 : i32 to vector<8x128xi32>
    %5 = arith.cmpi eq, %1, %4 : vector<8x128xi32>
    %c0_1 = arith.constant 0 : index
    %c0_2 = arith.constant 0 : index
    %6 = vector.load %arg2[%c0_1, %c0_2] : memref<8x1xf32, #tpu.memory_space<vmem>>, vector<8x1xf32>
    %7 = vector.shape_cast %6 : vector<8x1xf32> to vector<8x1xf32>
    %8 = vector.broadcast %7 : vector<8x1xf32> to vector<8x128xf32>
    %c0_3 = arith.constant 0 : index
    %c0_4 = arith.constant 0 : index
    %9 = vector.load %arg4[%c0_3, %c0_4] : memref<8x1xf32, #tpu.memory_space<vmem>>, vector<8x1xf32>
    %10 = vector.shape_cast %9 : vector<8x1xf32> to vector<8x1xf32>
    %11 = vector.broadcast %10 : vector<8x1xf32> to vector<8x128xf32>
    %c0_5 = arith.constant 0 : index
    %c0_6 = arith.constant 0 : index
    %12 = vector.load %arg6[%c0_5, %c0_6] : memref<8x1xf32, #tpu.memory_space<vmem>>, vector<8x1xf32>
    %13 = vector.shape_cast %12 : vector<8x1xf32> to vector<8x1xf32>
    %14 = vector.broadcast %13 : vector<8x1xf32> to vector<8x128xf32>
    %c0_7 = arith.constant 0 : index
    %c0_8 = arith.constant 0 : index
    %15 = vector.load %arg1[%c0_7, %c0_8] : memref<8x24xf32, #tpu.memory_space<vmem>>, vector<8x24xf32>
    %c1_i32 = arith.constant 1 : i32
    %16 = tpu.dynamic_rotate %0 by %c1_i32 dim 1 : vector<8x128xf32>, i32 -> vector<8x128xf32>
    %cst = arith.constant 0.000000e+00 : f32
    %17 = vector.broadcast %cst : f32 to vector<8x128xf32>
    %18 = arith.select %3, %17, %16 : vector<8x128xi1>, vector<8x128xf32>
    %c127_i32_9 = arith.constant 127 : i32
    %19 = tpu.dynamic_rotate %0 by %c127_i32_9 dim 1 : vector<8x128xf32>, i32 -> vector<8x128xf32>
    %cst_10 = arith.constant 0.000000e+00 : f32
    %20 = vector.broadcast %cst_10 : f32 to vector<8x128xf32>
    %21 = arith.select %5, %20, %19 : vector<8x128xi1>, vector<8x128xf32>
    %22 = tpu.concatenate %18, %0, %21 in 0 : vector<8x128xf32>, vector<8x128xf32>, vector<8x128xf32> -> vector<24x128xf32>
    %cst_11 = arith.constant dense<0.000000e+00> : vector<8x128xf32>
    %23 = tpu.matmul %15, %22, %cst_11 {dimension_numbers = #tpu.dot_dimension_numbers<[1], [0], [0], [1], [0, 0, 1, 1], [], []>} : vector<8x24xf32>, vector<24x128xf32>, vector<8x128xf32> -> vector<8x128xf32>
    %24 = arith.addf %23, %8 : vector<8x128xf32>
    %c1_i32_12 = arith.constant 1 : i32
    %25 = tpu.dynamic_rotate %24 by %c1_i32_12 dim 1 : vector<8x128xf32>, i32 -> vector<8x128xf32>
    %cst_13 = arith.constant 0.000000e+00 : f32
    %26 = vector.broadcast %cst_13 : f32 to vector<8x128xf32>
    %27 = arith.select %3, %26, %25 : vector<8x128xi1>, vector<8x128xf32>
    %c127_i32_14 = arith.constant 127 : i32
    %28 = tpu.dynamic_rotate %24 by %c127_i32_14 dim 1 : vector<8x128xf32>, i32 -> vector<8x128xf32>
    %cst_15 = arith.constant 0.000000e+00 : f32
    %29 = vector.broadcast %cst_15 : f32 to vector<8x128xf32>
    %30 = arith.select %5, %29, %28 : vector<8x128xi1>, vector<8x128xf32>
    %31 = tpu.concatenate %27, %24, %30 in 0 : vector<8x128xf32>, vector<8x128xf32>, vector<8x128xf32> -> vector<24x128xf32>
    %cst_16 = arith.constant dense<0.000000e+00> : vector<8x128xf32>
    %32 = tpu.matmul %15, %31, %cst_16 {dimension_numbers = #tpu.dot_dimension_numbers<[1], [0], [0], [1], [0, 0, 1, 1], [], []>} : vector<8x24xf32>, vector<24x128xf32>, vector<8x128xf32> -> vector<8x128xf32>
    %33 = arith.addf %32, %8 : vector<8x128xf32>
    %34 = arith.addf %33, %24 : vector<8x128xf32>
    %c1_i32_17 = arith.constant 1 : i32
    %35 = tpu.dynamic_rotate %34 by %c1_i32_17 dim 1 : vector<8x128xf32>, i32 -> vector<8x128xf32>
    %cst_18 = arith.constant 0.000000e+00 : f32
    %36 = vector.broadcast %cst_18 : f32 to vector<8x128xf32>
    %37 = arith.select %3, %36, %35 : vector<8x128xi1>, vector<8x128xf32>
    %c127_i32_19 = arith.constant 127 : i32
    %38 = tpu.dynamic_rotate %34 by %c127_i32_19 dim 1 : vector<8x128xf32>, i32 -> vector<8x128xf32>
    %cst_20 = arith.constant 0.000000e+00 : f32
    %39 = vector.broadcast %cst_20 : f32 to vector<8x128xf32>
    %40 = arith.select %5, %39, %38 : vector<8x128xi1>, vector<8x128xf32>
    %41 = tpu.concatenate %37, %34, %40 in 0 : vector<8x128xf32>, vector<8x128xf32>, vector<8x128xf32> -> vector<24x128xf32>
    %cst_21 = arith.constant dense<0.000000e+00> : vector<8x128xf32>
    %42 = tpu.matmul %15, %41, %cst_21 {dimension_numbers = #tpu.dot_dimension_numbers<[1], [0], [0], [1], [0, 0, 1, 1], [], []>} : vector<8x24xf32>, vector<24x128xf32>, vector<8x128xf32> -> vector<8x128xf32>
    %43 = arith.addf %42, %8 : vector<8x128xf32>
    %c1_i32_22 = arith.constant 1 : i32
    %44 = tpu.dynamic_rotate %43 by %c1_i32_22 dim 1 : vector<8x128xf32>, i32 -> vector<8x128xf32>
    %cst_23 = arith.constant 0.000000e+00 : f32
    %45 = vector.broadcast %cst_23 : f32 to vector<8x128xf32>
    %46 = arith.select %3, %45, %44 : vector<8x128xi1>, vector<8x128xf32>
    %c127_i32_24 = arith.constant 127 : i32
    %47 = tpu.dynamic_rotate %43 by %c127_i32_24 dim 1 : vector<8x128xf32>, i32 -> vector<8x128xf32>
    %cst_25 = arith.constant 0.000000e+00 : f32
    %48 = vector.broadcast %cst_25 : f32 to vector<8x128xf32>
    %49 = arith.select %5, %48, %47 : vector<8x128xi1>, vector<8x128xf32>
    %50 = tpu.concatenate %46, %43, %49 in 0 : vector<8x128xf32>, vector<8x128xf32>, vector<8x128xf32> -> vector<24x128xf32>
    %cst_26 = arith.constant dense<0.000000e+00> : vector<8x128xf32>
    %51 = tpu.matmul %15, %50, %cst_26 {dimension_numbers = #tpu.dot_dimension_numbers<[1], [0], [0], [1], [0, 0, 1, 1], [], []>} : vector<8x24xf32>, vector<24x128xf32>, vector<8x128xf32> -> vector<8x128xf32>
    %52 = arith.addf %51, %8 : vector<8x128xf32>
    %53 = arith.addf %52, %43 : vector<8x128xf32>
    %c1_i32_27 = arith.constant 1 : i32
    %54 = tpu.dynamic_rotate %53 by %c1_i32_27 dim 1 : vector<8x128xf32>, i32 -> vector<8x128xf32>
    %cst_28 = arith.constant 0.000000e+00 : f32
    %55 = vector.broadcast %cst_28 : f32 to vector<8x128xf32>
    %56 = arith.select %3, %55, %54 : vector<8x128xi1>, vector<8x128xf32>
    %c127_i32_29 = arith.constant 127 : i32
    %57 = tpu.dynamic_rotate %53 by %c127_i32_29 dim 1 : vector<8x128xf32>, i32 -> vector<8x128xf32>
    %cst_30 = arith.constant 0.000000e+00 : f32
    %58 = vector.broadcast %cst_30 : f32 to vector<8x128xf32>
    %59 = arith.select %5, %58, %57 : vector<8x128xi1>, vector<8x128xf32>
    %60 = tpu.concatenate %56, %53, %59 in 0 : vector<8x128xf32>, vector<8x128xf32>, vector<8x128xf32> -> vector<24x128xf32>
    %cst_31 = arith.constant dense<0.000000e+00> : vector<8x128xf32>
    %61 = tpu.matmul %15, %60, %cst_31 {dimension_numbers = #tpu.dot_dimension_numbers<[1], [0], [0], [1], [0, 0, 1, 1], [], []>} : vector<8x24xf32>, vector<24x128xf32>, vector<8x128xf32> -> vector<8x128xf32>
    %62 = arith.addf %61, %8 : vector<8x128xf32>
    %63 = arith.addf %62, %53 : vector<8x128xf32>
    %c0_32 = arith.constant 0 : index
    %c0_33 = arith.constant 0 : index
    %64 = vector.load %arg3[%c0_32, %c0_33] : memref<8x24xf32, #tpu.memory_space<vmem>>, vector<8x24xf32>
    %c1_i32_34 = arith.constant 1 : i32
    %65 = tpu.dynamic_rotate %63 by %c1_i32_34 dim 1 : vector<8x128xf32>, i32 -> vector<8x128xf32>
    %cst_35 = arith.constant 0.000000e+00 : f32
    %66 = vector.broadcast %cst_35 : f32 to vector<8x128xf32>
    %67 = arith.select %3, %66, %65 : vector<8x128xi1>, vector<8x128xf32>
    %c127_i32_36 = arith.constant 127 : i32
    %68 = tpu.dynamic_rotate %63 by %c127_i32_36 dim 1 : vector<8x128xf32>, i32 -> vector<8x128xf32>
    %cst_37 = arith.constant 0.000000e+00 : f32
    %69 = vector.broadcast %cst_37 : f32 to vector<8x128xf32>
    %70 = arith.select %5, %69, %68 : vector<8x128xi1>, vector<8x128xf32>
    %71 = tpu.concatenate %67, %63, %70 in 0 : vector<8x128xf32>, vector<8x128xf32>, vector<8x128xf32> -> vector<24x128xf32>
    %cst_38 = arith.constant dense<0.000000e+00> : vector<8x128xf32>
    %72 = tpu.matmul %64, %71, %cst_38 {dimension_numbers = #tpu.dot_dimension_numbers<[1], [0], [0], [1], [0, 0, 1, 1], [], []>} : vector<8x24xf32>, vector<24x128xf32>, vector<8x128xf32> -> vector<8x128xf32>
    %73 = arith.addf %72, %11 : vector<8x128xf32>
    %cst_39 = arith.constant 0.000000e+00 : f32
    %74 = vector.broadcast %cst_39 : f32 to vector<8x128xf32>
    %75 = arith.maximumf %73, %74 : vector<8x128xf32>
    %c0_40 = arith.constant 0 : index
    %c0_41 = arith.constant 0 : index
    %76 = vector.load %arg5[%c0_40, %c0_41] : memref<8x24xf32, #tpu.memory_space<vmem>>, vector<8x24xf32>
    %c1_i32_42 = arith.constant 1 : i32
    %77 = tpu.dynamic_rotate %75 by %c1_i32_42 dim 1 : vector<8x128xf32>, i32 -> vector<8x128xf32>
    %cst_43 = arith.constant 0.000000e+00 : f32
    %78 = vector.broadcast %cst_43 : f32 to vector<8x128xf32>
    %79 = arith.select %3, %78, %77 : vector<8x128xi1>, vector<8x128xf32>
    %c127_i32_44 = arith.constant 127 : i32
    %80 = tpu.dynamic_rotate %75 by %c127_i32_44 dim 1 : vector<8x128xf32>, i32 -> vector<8x128xf32>
    %cst_45 = arith.constant 0.000000e+00 : f32
    %81 = vector.broadcast %cst_45 : f32 to vector<8x128xf32>
    %82 = arith.select %5, %81, %80 : vector<8x128xi1>, vector<8x128xf32>
    %83 = tpu.concatenate %79, %75, %82 in 0 : vector<8x128xf32>, vector<8x128xf32>, vector<8x128xf32> -> vector<24x128xf32>
    %cst_46 = arith.constant dense<0.000000e+00> : vector<8x128xf32>
    %84 = tpu.matmul %76, %83, %cst_46 {dimension_numbers = #tpu.dot_dimension_numbers<[1], [0], [0], [1], [0, 0, 1, 1], [], []>} : vector<8x24xf32>, vector<24x128xf32>, vector<8x128xf32> -> vector<8x128xf32>
    %85 = arith.addf %84, %14 : vector<8x128xf32>
    %86 = arith.addf %85, %63 : vector<8x128xf32>
    %cst_47 = arith.constant 0.000000e+00 : f32
    %87 = vector.broadcast %cst_47 : f32 to vector<8x128xf32>
    %88 = arith.maximumf %86, %87 : vector<8x128xf32>
    %c0_48 = arith.constant 0 : index
    %c0_49 = arith.constant 0 : index
    %89 = vector.load %arg7[%c0_48, %c0_49] : memref<8x128xf32, #tpu.memory_space<vmem>>, vector<8x128xf32>
    tpu.vector_store %arg7[%c0_48, %c0_49], %88 {strides = array<i32>} : memref<8x128xf32, #tpu.memory_space<vmem>>, vector<8x128xf32>,
    return
  }
}

</mosaic_0001>

<llo_original>
// kernel: tpu_custom_call.1
$region0: #{tpu_custom_call.1}
  #allocation0 [shape = 'u32[]', space=smem, size = 0x4, offset = 0x4, fixed_abs, tag = 'smem constant byte address 0x4 - core index']
  #allocation1 [shape = 'u32[72,128]{1,0:T(1,128)}', space=vmem, size = 0x9000, scoped, tag = 'internal scratch']
  %s0 = inlined_call_operand.vmem [shape: f32[8,128], index: 0, kind: input, shape index: {}]
  %s1 = inlined_call_operand.vmem [shape: f32[8,24], index: 1, kind: input, shape index: {}]
  %s2 = inlined_call_operand.vmem [shape: f32[8,1], index: 2, kind: input, shape index: {}]
  %s3 = inlined_call_operand.vmem [shape: f32[8,24], index: 3, kind: input, shape index: {}]
  %s4 = inlined_call_operand.vmem [shape: f32[8,1], index: 4, kind: input, shape index: {}]
  %s5 = inlined_call_operand.hbm [shape: f32[8,24], index: 5, kind: input, shape index: {}]
  %s6 = inlined_call_operand.vmem [shape: f32[8,1], index: 6, kind: input, shape index: {}]
  %s7 = inlined_call_operand.hbm [shape: f32[8,128], index: 7, kind: output, shape index: {}]
  %s8 = sld [smem:[#allocation0]]
  $region42: #{tpu_custom_call.1} parent=0
    _
  %s10 = ssub.s32 1, %s8
  %s11 = scalar_select 0, %s10, %s8
  $region1: #{tpu_custom_call.1} parent=0
    #allocation2 [shape = 'u8[4096]{0}', space=vmem, size = 0x1000, scoped, tag = 'input window, operand 5, single buffered']
    #allocation3 [shape = 's32[1]{0}', space=sflag, size = 0x4, scoped, tag = 'scoped memory for tpu_custom_call.1']
    #allocation4 [shape = 's32[1]{0}', space=sflag, size = 0x4, scoped, tag = 'scoped memory for tpu_custom_call.1']
    #allocation5 [shape = 'u8[4096]{0}', space=vmem, size = 0x1000, scoped, tag = 'output window, operand 0, single buffered']
    %12 = vsyncpa [#allocation3], 0
    %13 = vsyncpa [#allocation4], 0
    // Predicated region
    $region2: #{tpu_custom_call.1} parent=1 // pred_check
      _
    $region3: #{tpu_custom_call.1} parent=1 // pred_check_branch
      %15 = sbr.rel (0) target = $region5
    $region4: #{tpu_custom_call.1} parent=1 // pred_region
      _
    $region5: #{tpu_custom_call.1} parent=1 // pred_fallthru
      _
    // Predicated region
    $region6: #{tpu_custom_call.1} parent=1 // pred_check
      _
    $region7: #{tpu_custom_call.1} parent=1 // pred_check_branch
      %17 = sbr.rel (0) target = $region9
    $region8: #{tpu_custom_call.1} parent=1 // pred_region
      _
    $region9: #{tpu_custom_call.1} parent=1 // pred_fallthru
      _
    // Predicated region
    $region10: #{tpu_custom_call.1} parent=1 // pred_check
      _
    $region11: #{tpu_custom_call.1} parent=1 // pred_check_branch
      %19 = sbr.rel (0) target = $region13
    $region12: #{tpu_custom_call.1} parent=1 // pred_region
      _
    $region13: #{tpu_custom_call.1} parent=1 // pred_fallthru
      _
    // Predicated region
    $region14: #{tpu_custom_call.1} parent=1 // pred_check
      _
    $region15: #{tpu_custom_call.1} parent=1 // pred_check_branch
      %21 = sbr.rel (0) target = $region17
    $region16: #{tpu_custom_call.1} parent=1 // pred_region
      _
    $region17: #{tpu_custom_call.1} parent=1 // pred_fallthru
      _
    // Predicated region
    $region18: #{tpu_custom_call.1} parent=1 // pred_check
      _
    $region19: #{tpu_custom_call.1} parent=1 // pred_check_branch
      %23 = sbr.rel (0) target = $region21
    $region20: #{tpu_custom_call.1} parent=1 // pred_region
      _
    $region21: #{tpu_custom_call.1} parent=1 // pred_fallthru
      _
    // Predicated region
    $region22: #{tpu_custom_call.1} parent=1 // pred_check
      _
    $region23: #{tpu_custom_call.1} parent=1 // pred_check_branch
      %25 = sbr.rel (0) target = $region25
    $region24: #{tpu_custom_call.1} parent=1 // pred_region
      %27 = vsyncadd [#allocation3], 0
      %s29 = sshll.u32 %s5, 4
      %s30 = int_to_ptr.hbm [resolvable:$true] %s29
      %s31 = sshll.u32 [#allocation2], 4
      %s32 = int_to_ptr.vmem [resolvable:$true] %s31
      %34 = dma.hbm_to_vmem [thread:$0]  %s30, 128, %s32, [#allocation3]
    $region25: #{tpu_custom_call.1} parent=1 // pred_fallthru
      _
    // Predicated region
    $region26: #{tpu_custom_call.1} parent=1 // pred_check
      _
    $region27: #{tpu_custom_call.1} parent=1 // pred_check_branch
      %36 = sbr.rel (0) target = $region29
    $region28: #{tpu_custom_call.1} parent=1 // pred_region
      _
    $region29: #{tpu_custom_call.1} parent=1 // pred_fallthru
      _
    // Predicated region
    $region30: #{tpu_custom_call.1} parent=1 // pred_check
      _
    $region31: #{tpu_custom_call.1} parent=1 // pred_check_branch
      %38 = sbr.rel (0) target = $region33
    $region32: #{tpu_custom_call.1} parent=1 // pred_region
      %40 = dma.done [#allocation3], 128
    $region33: #{tpu_custom_call.1} parent=1 // pred_fallthru
      _
    %v41 = vld [vmem:[%s0] sm:$0xff]
    %v42 = vlaneseq
    %v43 = vand.u32 %v42, 127
    %vm44 = vcmp.eq.s32.totalorder %v43, 0
    %vm45 = vcmp.eq.s32.totalorder %v43, 127
    %v46 = vld [vmem:[%s2] sm:$0xff]
    %48 = vset.pattern.permute.xlu0 0
    %49 = vperm.xlu0 %48, %v46
    %v50 = vpop.permute.xlu0 %49
    %v52 = vld [vmem:[%s4] sm:$0xff]
    %54 = vset.pattern.permute.xlu0 0
    %55 = vperm.xlu0 %54, %v52
    %v56 = vpop.permute.xlu0 %55
    %v58 = vld [vmem:[%s6] sm:$0xff]
    %60 = vset.pattern.permute.xlu0 0
    %61 = vperm.xlu0 %60, %v58
    %v62 = vpop.permute.xlu0 %61
    %v64 = vld [vmem:[%s1] sm:$0xff]
    %65 = vrot.lane.b32.xlu0 %v41, 1
    %v66 = vpop.permute.xlu0 %65
    %v67 = vsel %vm44, 0.0, %v66
    %68 = vrot.lane.b32.xlu0 %v41, 127
    %v69 = vpop.permute.xlu0 %68
    %v70 = vsel %vm45, 0.0, %v69
    %vm71 = vcmask 195584
    %v73 = vsel %vm71, %v64, 0
    %75 = vmatpush.msra.mxu0 0.0
    %76 = vmatpush.msra.mxu0 0.0
    %77 = vmatpush.msra.mxu0 0.0
    %78 = vmatpush.msra.mxu0 0.0
    %79 = vmatpush.msra.mxu0 0.0
    %80 = vmatpush.msra.mxu0 0.0
    %81 = vmatpush.msra.mxu0 0.0
    %82 = vmatpush.msra.mxu0 0.0
    %83 = vmatpush.msra.mxu0 0.0
    %84 = vmatpush.msra.mxu0 0.0
    %85 = vmatpush.msra.mxu0 0.0
    %86 = vmatpush.msra.mxu0 0.0
    %87 = vmatpush.msra.mxu0 0.0
    %88 = vmatpush.msra.mxu0 %v70
    %89 = vmatpush.msra.mxu0 %v41
    %90 = vmatpush.msra.mxu0 %v67
    %91 = vmatmul.f32.gmra.mxu0 %v73
    %v92 = vpop.f32.mrf.mxu0
    %v93 = vadd.f32 %v50, %v92
    %94 = vdwg.mxu0
    %95 = vrot.lane.b32.xlu0 %v93, 1
    %v96 = vpop.permute.xlu0 %95
    %v97 = vsel %vm44, 0.0, %v96
    %98 = vrot.lane.b32.xlu0 %v93, 127
    %v99 = vpop.permute.xlu0 %98
    %v100 = vsel %vm45, 0.0, %v99
    %101 = vmatpush.msra.mxu0 0.0
    %102 = vmatpush.msra.mxu0 0.0
    %103 = vmatpush.msra.mxu0 0.0
    %104 = vmatpush.msra.mxu0 0.0
    %105 = vmatpush.msra.mxu0 0.0
    %106 = vmatpush.msra.mxu0 0.0
    %107 = vmatpush.msra.mxu0 0.0
    %108 = vmatpush.msra.mxu0 0.0
    %109 = vmatpush.msra.mxu0 0.0
    %110 = vmatpush.msra.mxu0 0.0
    %111 = vmatpush.msra.mxu0 0.0
    %112 = vmatpush.msra.mxu0 0.0
    %113 = vmatpush.msra.mxu0 0.0
    %114 = vmatpush.msra.mxu0 %v100
    %115 = vmatpush.msra.mxu0 %v93
    %116 = vmatpush.msra.mxu0 %v97
    %117 = vmatmul.f32.gmra.mxu0 %v73
    %v118 = vpop.f32.mrf.mxu0
    %v119 = vadd.f32 %v50, %v118
    %120 = vdwg.mxu0
    %v121 = vadd.f32 %v119, %v93
    %122 = vrot.lane.b32.xlu0 %v121, 1
    %v123 = vpop.permute.xlu0 %122
    %v124 = vsel %vm44, 0.0, %v123
    %125 = vrot.lane.b32.xlu0 %v121, 127
    %v126 = vpop.permute.xlu0 %125
    %v127 = vsel %vm45, 0.0, %v126
    %128 = vmatpush.msra.mxu0 0.0
    %129 = vmatpush.msra.mxu0 0.0
    %130 = vmatpush.msra.mxu0 0.0
    %131 = vmatpush.msra.mxu0 0.0
    %132 = vmatpush.msra.mxu0 0.0
    %133 = vmatpush.msra.mxu0 0.0
    %134 = vmatpush.msra.mxu0 0.0
    %135 = vmatpush.msra.mxu0 0.0
    %136 = vmatpush.msra.mxu0 0.0
    %137 = vmatpush.msra.mxu0 0.0
    %138 = vmatpush.msra.mxu0 0.0
    %139 = vmatpush.msra.mxu0 0.0
    %140 = vmatpush.msra.mxu0 0.0
    %141 = vmatpush.msra.mxu0 %v127
    %142 = vmatpush.msra.mxu0 %v121
    %143 = vmatpush.msra.mxu0 %v124
    %144 = vmatmul.f32.gmra.mxu0 %v73
    %v145 = vpop.f32.mrf.mxu0
    %v146 = vadd.f32 %v50, %v145
    %147 = vdwg.mxu0
    %148 = vrot.lane.b32.xlu0 %v146, 1
    %v149 = vpop.permute.xlu0 %148
    %v150 = vsel %vm44, 0.0, %v149
    %151 = vrot.lane.b32.xlu0 %v146, 127
    %v152 = vpop.permute.xlu0 %151
    %v153 = vsel %vm45, 0.0, %v152
    %154 = vmatpush.msra.mxu0 0.0
    %155 = vmatpush.msra.mxu0 0.0
    %156 = vmatpush.msra.mxu0 0.0
    %157 = vmatpush.msra.mxu0 0.0
    %158 = vmatpush.msra.mxu0 0.0
    %159 = vmatpush.msra.mxu0 0.0
    %160 = vmatpush.msra.mxu0 0.0
    %161 = vmatpush.msra.mxu0 0.0
    %162 = vmatpush.msra.mxu0 0.0
    %163 = vmatpush.msra.mxu0 0.0
    %164 = vmatpush.msra.mxu0 0.0
    %165 = vmatpush.msra.mxu0 0.0
    %166 = vmatpush.msra.mxu0 0.0
    %167 = vmatpush.msra.mxu0 %v153
    %168 = vmatpush.msra.mxu0 %v146
    %169 = vmatpush.msra.mxu0 %v150
    %170 = vmatmul.f32.gmra.mxu0 %v73
    %v171 = vpop.f32.mrf.mxu0
    %v172 = vadd.f32 %v50, %v171
    %173 = vdwg.mxu0
    %v174 = vadd.f32 %v172, %v146
    %175 = vrot.lane.b32.xlu0 %v174, 1
    %v176 = vpop.permute.xlu0 %175
    %v177 = vsel %vm44, 0.0, %v176
    %178 = vrot.lane.b32.xlu0 %v174, 127
    %v179 = vpop.permute.xlu0 %178
    %v180 = vsel %vm45, 0.0, %v179
    %181 = vmatpush.msra.mxu0 0.0
    %182 = vmatpush.msra.mxu0 0.0
    %183 = vmatpush.msra.mxu0 0.0
    %184 = vmatpush.msra.mxu0 0.0
    %185 = vmatpush.msra.mxu0 0.0
    %186 = vmatpush.msra.mxu0 0.0
    %187 = vmatpush.msra.mxu0 0.0
    %188 = vmatpush.msra.mxu0 0.0
    %189 = vmatpush.msra.mxu0 0.0
    %190 = vmatpush.msra.mxu0 0.0
    %191 = vmatpush.msra.mxu0 0.0
    %192 = vmatpush.msra.mxu0 0.0
    %193 = vmatpush.msra.mxu0 0.0
    %194 = vmatpush.msra.mxu0 %v180
    %195 = vmatpush.msra.mxu0 %v174
    %196 = vmatpush.msra.mxu0 %v177
    %197 = vmatmul.f32.gmra.mxu0 %v73
    %v198 = vpop.f32.mrf.mxu0
    %v199 = vadd.f32 %v50, %v198
    %200 = vdwg.mxu0
    %v201 = vadd.f32 %v199, %v174
    %v202 = vld [vmem:[%s3] sm:$0xff]
    %203 = vrot.lane.b32.xlu0 %v201, 1
    %v204 = vpop.permute.xlu0 %203
    %v205 = vsel %vm44, 0.0, %v204
    %206 = vrot.lane.b32.xlu0 %v201, 127
    %v207 = vpop.permute.xlu0 %206
    %v208 = vsel %vm45, 0.0, %v207
    %v210 = vsel %vm71, %v202, 0
    %212 = vmatpush.msra.mxu0 0.0
    %213 = vmatpush.msra.mxu0 0.0
    %214 = vmatpush.msra.mxu0 0.0
    %215 = vmatpush.msra.mxu0 0.0
    %216 = vmatpush.msra.mxu0 0.0
    %217 = vmatpush.msra.mxu0 0.0
    %218 = vmatpush.msra.mxu0 0.0
    %219 = vmatpush.msra.mxu0 0.0
    %220 = vmatpush.msra.mxu0 0.0
    %221 = vmatpush.msra.mxu0 0.0
    %222 = vmatpush.msra.mxu0 0.0
    %223 = vmatpush.msra.mxu0 0.0
    %224 = vmatpush.msra.mxu0 0.0
    %225 = vmatpush.msra.mxu0 %v208
    %226 = vmatpush.msra.mxu0 %v201
    %227 = vmatpush.msra.mxu0 %v205
    %228 = vmatmul.f32.gmra.mxu0 %v210
    %v229 = vpop.f32.mrf.mxu0
    %v230 = vadd.f32 %v56, %v229
    %231 = vdwg.mxu0
    %v232 = vmax.f32 %v230, 0.0
    %v233 = vld [vmem:[#allocation2] sm:$0xff]
    %234 = vrot.lane.b32.xlu0 %v232, 1
    %v235 = vpop.permute.xlu0 %234
    %v236 = vsel %vm44, 0.0, %v235
    %237 = vrot.lane.b32.xlu0 %v232, 127
    %v238 = vpop.permute.xlu0 %237
    %v239 = vsel %vm45, 0.0, %v238
    %v241 = vsel %vm71, %v233, 0
    %243 = vmatpush.msra.mxu0 0.0
    %244 = vmatpush.msra.mxu0 0.0
    %245 = vmatpush.msra.mxu0 0.0
    %246 = vmatpush.msra.mxu0 0.0
    %247 = vmatpush.msra.mxu0 0.0
    %248 = vmatpush.msra.mxu0 0.0
    %249 = vmatpush.msra.mxu0 0.0
    %250 = vmatpush.msra.mxu0 0.0
    %251 = vmatpush.msra.mxu0 0.0
    %252 = vmatpush.msra.mxu0 0.0
    %253 = vmatpush.msra.mxu0 0.0
    %254 = vmatpush.msra.mxu0 0.0
    %255 = vmatpush.msra.mxu0 0.0
    %256 = vmatpush.msra.mxu0 %v239
    %257 = vmatpush.msra.mxu0 %v232
    %258 = vmatpush.msra.mxu0 %v236
    %259 = vmatmul.f32.gmra.mxu0 %v241
    %v260 = vpop.f32.mrf.mxu0
    %v261 = vadd.f32 %v62, %v260
    %262 = vdwg.mxu0
    %v263 = vadd.f32 %v261, %v201
    %v264 = vmax.f32 %v263, 0.0
    %265 = vst [vmem:[#allocation5] sm:$0xff] %v264
    // Predicated region
    $region34: #{tpu_custom_call.1} parent=1 // pred_check
      _
    $region35: #{tpu_custom_call.1} parent=1 // pred_check_branch
      %267 = sbr.rel (0) target = $region37
    $region36: #{tpu_custom_call.1} parent=1 // pred_region
      %269 = vsyncadd [#allocation4], 0
      %s271 = sshll.u32 [#allocation5], 4
      %s272 = int_to_ptr.vmem [resolvable:$true] %s271
      %s273 = sshll.u32 %s7, 4
      %s274 = int_to_ptr.hbm [resolvable:$true] %s273
      %276 = dma.vmem_to_hbm [thread:$0]  %s272, 128, %s274, [#allocation4]
    $region37: #{tpu_custom_call.1} parent=1 // pred_fallthru
      _
    // Predicated region
    $region38: #{tpu_custom_call.1} parent=1 // pred_check
      _
    $region39: #{tpu_custom_call.1} parent=1 // pred_check_branch
      %278 = sbr.rel (0) target = $region41
    $region40: #{tpu_custom_call.1} parent=1 // pred_region
      %280 = dma.done [#allocation4], 128
    $region41: #{tpu_custom_call.1} parent=1 // pred_fallthru
      _
    %281 = vsyncpa [#allocation3], 1
    %282 = vsyncpa [#allocation4], 1

</llo_original>
